<compile_context>
chip_gen: v7x
topology: tpu7x:2x2x1
jax: 0.10.0
libtpu: 0.0.40
codegen_flags: <defaults>
</compile_context>

<pallas_src>
import jax
import jax.numpy as jnp
from jax.experimental import pallas as pl
from jax.experimental.pallas import tpu as pltpu

IN_F, HID_F, OUT_F = 13, 20, 6
_LANE = 128


def _net_kernel(x_ref, w1_ref, b1_ref, w2_ref, b2_ref, o_ref):
    # x_ref: (13, B_BLK), w1_ref: (20, 13), b1_ref: (20, 1)
    h = jnp.dot(w1_ref[...], x_ref[...], preferred_element_type=jnp.float32)
    h = jax.nn.sigmoid(h + b1_ref[...])            # (20, B_BLK) + (20, 1)
    # w2_ref: (6, 20), b2_ref: (6, 1)
    o = jnp.dot(w2_ref[...], h, preferred_element_type=jnp.float32)
    o_ref[...] = (o + b2_ref[...]).astype(o_ref.dtype)


def net_forward(x, w1, b1, w2, b2, *, b_blk=8192):
    """x: (B, 13) f32; w1: (20, 13); b1: (20, 1); w2: (6, 20); b2: (6, 1).

    Returns (B, 6) f32.
    """
    B = x.shape[0]

    # Batch block: multiple of 128 lanes, no larger than the (padded) batch.
    b_needed = pl.cdiv(B, _LANE) * _LANE
    b_blk = max(_LANE, min(int(b_blk), b_needed))
    b_blk = pl.cdiv(b_blk, _LANE) * _LANE
    b_pad = pl.cdiv(B, b_blk) * b_blk

    # Pad batch and put it on the lane axis: (13, B_pad).
    xt = jnp.pad(x, ((0, b_pad - B), (0, 0))).T

    grid = (b_pad // b_blk,)
    out_t = pl.pallas_call(
        _net_kernel,
        out_shape=jax.ShapeDtypeStruct((OUT_F, b_pad), jnp.float32),
        grid=grid,
        in_specs=[
            # Streamed input: batch-tiled along lanes, auto double-buffered.
            pl.BlockSpec((IN_F, b_blk), lambda i: (0, i)),
            # Loop-invariant residents (constant block index).
            pl.BlockSpec((HID_F, IN_F), lambda i: (0, 0)),
            pl.BlockSpec((HID_F, 1), lambda i: (0, 0)),
            pl.BlockSpec((OUT_F, HID_F), lambda i: (0, 0)),
            pl.BlockSpec((OUT_F, 1), lambda i: (0, 0)),
        ],
        out_specs=pl.BlockSpec((OUT_F, b_blk), lambda i: (0, i)),
        compiler_params=pltpu.CompilerParams(
            dimension_semantics=("parallel",),
        ),
    )(xt, w1, b1, w2, b2)

    return out_t[:, :B].T


def init_params(key):
    """Deterministic init matching nn.Linear (uniform +/- 1/sqrt(fan_in)).

    Weights are kept in PyTorch's (out_features, in_features) layout; biases
    are stored as (out_features, 1) columns so they broadcast over the
    batch-on-lanes axis inside the kernel.
    """
    k1, k2, k3, k4 = jax.random.split(key, 4)
    bound1 = 1.0 / jnp.sqrt(float(IN_F))
    bound2 = 1.0 / jnp.sqrt(float(HID_F))
    w1 = jax.random.uniform(k1, (HID_F, IN_F), jnp.float32, -bound1, bound1)
    b1 = jax.random.uniform(k2, (HID_F, 1), jnp.float32, -bound1, bound1)
    w2 = jax.random.uniform(k3, (OUT_F, HID_F), jnp.float32, -bound2, bound2)
    b2 = jax.random.uniform(k4, (OUT_F, 1), jnp.float32, -bound2, bound2)
    return w1, b1, w2, b2


def reference_forward(x, w1, b1, w2, b2):
    h = jax.nn.sigmoid(x @ w1.T + b1[:, 0])
    return h @ w2.T + b2[:, 0]


if __name__ == "__main__":
    key = jax.random.PRNGKey(0)
    kx, kp = jax.random.split(key)

    batch = 8
    x = jax.random.normal(kx, (batch, IN_F), jnp.float32)
    w1, b1, w2, b2 = init_params(kp)

    out = net_forward(x, w1, b1, w2, b2)
    out = jax.block_until_ready(out)

    ref = reference_forward(x, w1, b1, w2, b2)
    assert out.shape == (batch, OUT_F), out.shape
    assert jnp.allclose(out, ref, atol=1e-5, rtol=1e-5), "mismatch vs reference"

    print("KERNEL_OK")
</pallas_src>

<mosaic_0001>
module attributes {stable_mosaic.version = 11 : i64} {
  func.func @_net_kernel(%arg0: i32, %arg1: memref<13x128xf32, #tpu.memory_space<vmem>>, %arg2: memref<20x13xf32, #tpu.memory_space<vmem>>, %arg3: memref<20x1xf32, #tpu.memory_space<vmem>>, %arg4: memref<6x20xf32, #tpu.memory_space<vmem>>, %arg5: memref<6x1xf32, #tpu.memory_space<vmem>>, %arg6: memref<6x128xf32, #tpu.memory_space<vmem>>) attributes {dimension_semantics = [#tpu.dimension_semantics<parallel>], iteration_bounds = array<i64: 1>, scalar_prefetch = 0 : i64, scratch_operands = 0 : i64, tpu.core_type = #tpu.core_type<tc>, window_params = [{transform_indices = @transform_0, window_bounds = array<i64: 13, 128>}, {pipeline_mode = #tpu.pipeline_mode<synchronous>, transform_indices = @transform_1, window_bounds = array<i64: 20, 13>}, {pipeline_mode = #tpu.pipeline_mode<synchronous>, transform_indices = @transform_2, window_bounds = array<i64: 20, 1>}, {pipeline_mode = #tpu.pipeline_mode<synchronous>, transform_indices = @transform_3, window_bounds = array<i64: 6, 20>}, {pipeline_mode = #tpu.pipeline_mode<synchronous>, transform_indices = @transform_4, window_bounds = array<i64: 6, 1>}, {transform_indices = @transform_5, window_bounds = array<i64: 6, 128>}]} {
    %c0 = arith.constant 0 : index
    %c0_0 = arith.constant 0 : index
    %0 = vector.load %arg2[%c0, %c0_0] : memref<20x13xf32, #tpu.memory_space<vmem>>, vector<20x13xf32>
    %c0_1 = arith.constant 0 : index
    %c0_2 = arith.constant 0 : index
    %1 = vector.load %arg1[%c0_1, %c0_2] : memref<13x128xf32, #tpu.memory_space<vmem>>, vector<13x128xf32>
    %cst = arith.constant dense<0.000000e+00> : vector<20x128xf32>
    %2 = tpu.matmul %0, %1, %cst {dimension_numbers = #tpu.dot_dimension_numbers<[1], [0], [0], [1], [0, 0, 1, 1], [], []>} : vector<20x13xf32>, vector<13x128xf32>, vector<20x128xf32> -> vector<20x128xf32>
    %c0_3 = arith.constant 0 : index
    %c0_4 = arith.constant 0 : index
    %3 = vector.load %arg3[%c0_3, %c0_4] : memref<20x1xf32, #tpu.memory_space<vmem>>, vector<20x1xf32>
    %4 = vector.broadcast %3 : vector<20x1xf32> to vector<20x128xf32>
    %5 = arith.addf %2, %4 : vector<20x128xf32>
    %6 = arith.negf %5 : vector<20x128xf32>
    %7 = math.exp %6 : vector<20x128xf32>
    %cst_5 = arith.constant 1.000000e+00 : f32
    %8 = vector.broadcast %cst_5 : f32 to vector<20x128xf32>
    %9 = arith.addf %8, %7 : vector<20x128xf32>
    %10 = arith.divf %8, %9 : vector<20x128xf32>
    %c0_6 = arith.constant 0 : index
    %c0_7 = arith.constant 0 : index
    %11 = vector.load %arg4[%c0_6, %c0_7] : memref<6x20xf32, #tpu.memory_space<vmem>>, vector<6x20xf32>
    %cst_8 = arith.constant dense<0.000000e+00> : vector<6x128xf32>
    %12 = tpu.matmul %11, %10, %cst_8 {dimension_numbers = #tpu.dot_dimension_numbers<[1], [0], [0], [1], [0, 0, 1, 1], [], []>} : vector<6x20xf32>, vector<20x128xf32>, vector<6x128xf32> -> vector<6x128xf32>
    %c0_9 = arith.constant 0 : index
    %c0_10 = arith.constant 0 : index
    %13 = vector.load %arg5[%c0_9, %c0_10] : memref<6x1xf32, #tpu.memory_space<vmem>>, vector<6x1xf32>
    %14 = vector.broadcast %13 : vector<6x1xf32> to vector<6x128xf32>
    %15 = arith.addf %12, %14 : vector<6x128xf32>
    %c0_11 = arith.constant 0 : index
    %c0_12 = arith.constant 0 : index
    %16 = vector.load %arg6[%c0_11, %c0_12] : memref<6x128xf32, #tpu.memory_space<vmem>>, vector<6x128xf32>
    tpu.vector_store %arg6[%c0_11, %c0_12], %15 {strides = array<i32>} : memref<6x128xf32, #tpu.memory_space<vmem>>, vector<6x128xf32>,
    return
  }
  func.func @transform_0(%arg0: i32) -> (i32, i32) {
    %c0_i32 = arith.constant 0 : i32
    %c0_i32_0 = arith.constant 0 : i32
    return %c0_i32, %arg0 : i32, i32
  }
  func.func @transform_1(%arg0: i32) -> (i32, i32) {
    %c0_i32 = arith.constant 0 : i32
    %c0_i32_0 = arith.constant 0 : i32
    %c0_i32_1 = arith.constant 0 : i32
    return %c0_i32, %c0_i32_0 : i32, i32
  }
  func.func @transform_2(%arg0: i32) -> (i32, i32) {
    %c0_i32 = arith.constant 0 : i32
    %c0_i32_0 = arith.constant 0 : i32
    %c0_i32_1 = arith.constant 0 : i32
    return %c0_i32, %c0_i32_0 : i32, i32
  }
  func.func @transform_3(%arg0: i32) -> (i32, i32) {
    %c0_i32 = arith.constant 0 : i32
    %c0_i32_0 = arith.constant 0 : i32
    %c0_i32_1 = arith.constant 0 : i32
    return %c0_i32, %c0_i32_0 : i32, i32
  }
  func.func @transform_4(%arg0: i32) -> (i32, i32) {
    %c0_i32 = arith.constant 0 : i32
    %c0_i32_0 = arith.constant 0 : i32
    %c0_i32_1 = arith.constant 0 : i32
    return %c0_i32, %c0_i32_0 : i32, i32
  }
  func.func @transform_5(%arg0: i32) -> (i32, i32) {
    %c0_i32 = arith.constant 0 : i32
    %c0_i32_0 = arith.constant 0 : i32
    return %c0_i32, %arg0 : i32, i32
  }
}

</mosaic_0001>

<llo_original>
// kernel: tpu_custom_call.1
$region0: #{tpu_custom_call.1}
  #allocation0 [shape = 'u32[]', space=smem, size = 0x4, offset = 0x4, fixed_abs, tag = 'smem constant byte address 0x4 - core index']
  #allocation1 [shape = 'u32[144,128]{1,0:T(1,128)}', space=vmem, size = 0x12000, scoped, tag = 'internal scratch']
  %s0 = inlined_call_operand.vmem [shape: f32[13,128], index: 0, kind: input, shape index: {}]
  %s1 = inlined_call_operand.vmem [shape: f32[20,13], index: 1, kind: input, shape index: {}]
  %s2 = inlined_call_operand.vmem [shape: f32[20,1], index: 2, kind: input, shape index: {}]
  %s3 = inlined_call_operand.vmem [shape: f32[6,20], index: 3, kind: input, shape index: {}]
  %s4 = inlined_call_operand.vmem [shape: f32[6,1], index: 4, kind: input, shape index: {}]
  %s5 = inlined_call_operand.hbm [shape: f32[6,128], index: 5, kind: output, shape index: {}]
  %s6 = sld [smem:[#allocation0]]
  $region30: #{tpu_custom_call.1} parent=0
    _
  %s8 = ssub.s32 1, %s6
  %s9 = scalar_select 0, %s8, %s6
  $region1: #{tpu_custom_call.1} parent=0
    #allocation2 [shape = 'u8[4096]{0}', space=vmem, size = 0x1000, scoped, tag = 'output window, operand 0, single buffered']
    #allocation3 [shape = 's32[1]{0}', space=sflag, size = 0x4, scoped, tag = 'scoped memory for tpu_custom_call.1']
    %10 = vsyncpa [#allocation3], 0
    // Predicated region
    $region2: #{tpu_custom_call.1} parent=1 // pred_check
      _
    $region3: #{tpu_custom_call.1} parent=1 // pred_check_branch
      %12 = sbr.rel (0) target = $region5
    $region4: #{tpu_custom_call.1} parent=1 // pred_region
      _
    $region5: #{tpu_custom_call.1} parent=1 // pred_fallthru
      _
    // Predicated region
    $region6: #{tpu_custom_call.1} parent=1 // pred_check
      _
    $region7: #{tpu_custom_call.1} parent=1 // pred_check_branch
      %14 = sbr.rel (0) target = $region9
    $region8: #{tpu_custom_call.1} parent=1 // pred_region
      _
    $region9: #{tpu_custom_call.1} parent=1 // pred_fallthru
      _
    // Predicated region
    $region10: #{tpu_custom_call.1} parent=1 // pred_check
      _
    $region11: #{tpu_custom_call.1} parent=1 // pred_check_branch
      %16 = sbr.rel (0) target = $region13
    $region12: #{tpu_custom_call.1} parent=1 // pred_region
      _
    $region13: #{tpu_custom_call.1} parent=1 // pred_fallthru
      _
    // Predicated region
    $region14: #{tpu_custom_call.1} parent=1 // pred_check
      _
    $region15: #{tpu_custom_call.1} parent=1 // pred_check_branch
      %18 = sbr.rel (0) target = $region17
    $region16: #{tpu_custom_call.1} parent=1 // pred_region
      _
    $region17: #{tpu_custom_call.1} parent=1 // pred_fallthru
      _
    // Predicated region
    $region18: #{tpu_custom_call.1} parent=1 // pred_check
      _
    $region19: #{tpu_custom_call.1} parent=1 // pred_check_branch
      %20 = sbr.rel (0) target = $region21
    $region20: #{tpu_custom_call.1} parent=1 // pred_region
      _
    $region21: #{tpu_custom_call.1} parent=1 // pred_fallthru
      _
    %v21 = vld [vmem:[%s1] sm:$0xff]
    %v22 = vld [vmem:[%s1 + $0x8] sm:$0xff]
    %v23 = vld [vmem:[%s1 + $0x10] sm:$0xf]
    %v24 = vld [vmem:[%s0] sm:$0xff]
    %v25 = vld [vmem:[%s0 + $0x8] sm:$0x1f]
    %v26 = vld [vmem:[%s2] sm:$0xff]
    %v27 = vld [vmem:[%s2 + $0x8] sm:$0xff]
    %v28 = vld [vmem:[%s2 + $0x10] sm:$0xf]
    %30 = vset.pattern.permute.xlu0 0
    %31 = vperm.xlu0 %30, %v26
    %v32 = vpop.permute.xlu0 %31
    %35 = vset.pattern.permute.xlu0 0
    %36 = vperm.xlu0 %35, %v27
    %v37 = vpop.permute.xlu0 %36
    %40 = vset.pattern.permute.xlu0 0
    %41 = vperm.xlu0 %40, %v28
    %v42 = vpop.permute.xlu0 %41
    %vm44 = vcmask 105472
    %v46 = vsel %vm44, %v21, 0
    %v49 = vsel %vm44, %v22, 0
    %v52 = vsel %vm44, %v23, 0
    %vm54 = vcmask 1044480
    %v56 = vsel %vm54, %v25, 0
    %58 = vmatprep.subr.mxu0 0.0
    %59 = vmatpush1.msra.mxu0 %v24
    %60 = vmatprep.subr.mxu0 0.0
    %61 = vmatpush1.msra.mxu0 %v56
    %62 = vmatprep.subr.mxu0 0.0
    %63 = vmatpush1.msra.mxu0 0.0
    %64 = vmatprep.subr.mxu0 0.0
    %65 = vmatpush1.msra.mxu0 0.0
    %66 = vmatprep.subr.mxu0 0.0
    %67 = vmatpush1.msra.mxu0 0.0
    %68 = vmatprep.subr.mxu0 0.0
    %69 = vmatpush1.msra.mxu0 0.0
    %70 = vmatprep.subr.mxu0 0.0
    %71 = vmatpush1.msra.mxu0 0.0
    %72 = vmatprep.subr.mxu0 0.0
    %73 = vmatpush1.msra.mxu0 0.0
    %74 = vmatprep.subr.mxu0 0.0
    %75 = vmatpush1.msra.mxu0 0.0
    %76 = vmatprep.subr.mxu0 0.0
    %77 = vmatpush1.msra.mxu0 0.0
    %78 = vmatprep.subr.mxu0 0.0
    %79 = vmatpush1.msra.mxu0 0.0
    %80 = vmatprep.subr.mxu0 0.0
    %81 = vmatpush1.msra.mxu0 0.0
    %82 = vmatprep.subr.mxu0 0.0
    %83 = vmatpush1.msra.mxu0 0.0
    %84 = vmatprep.subr.mxu0 0.0
    %85 = vmatpush1.msra.mxu0 0.0
    %86 = vmatprep.subr.mxu0 0.0
    %87 = vmatpush1.msra.mxu0 0.0
    %88 = vmatprep.subr.mxu0 0.0
    %89 = vmatpush1.msra.mxu0 0.0
    %90 = vmatprep.subr.mxu0 0.0
    %91 = vmatpush1.msra.mxu0 0.0
    %92 = vmatprep.subr.mxu0 0.0
    %93 = vmatpush1.msra.mxu0 0.0
    %94 = vmatprep.subr.mxu0 0.0
    %95 = vmatpush1.msra.mxu0 0.0
    %96 = vmatprep.subr.mxu0 0.0
    %97 = vmatpush1.msra.mxu0 0.0
    %98 = vmatprep.subr.mxu0 0.0
    %99 = vmatpush1.msra.mxu0 0.0
    %100 = vmatprep.subr.mxu0 0.0
    %101 = vmatpush1.msra.mxu0 0.0
    %102 = vmatprep.subr.mxu0 0.0
    %103 = vmatpush1.msra.mxu0 0.0
    %104 = vmatprep.subr.mxu0 0.0
    %105 = vmatpush1.msra.mxu0 0.0
    %106 = vmatprep.subr.mxu0 0.0
    %107 = vmatpush1.msra.mxu0 0.0
    %108 = vmatprep.subr.mxu0 0.0
    %109 = vmatpush1.msra.mxu0 0.0
    %110 = vmatprep.subr.mxu0 0.0
    %111 = vmatpush1.msra.mxu0 0.0
    %112 = vmatprep.subr.mxu0 0.0
    %113 = vmatpush1.msra.mxu0 0.0
    %114 = vmatprep.subr.mxu0 0.0
    %115 = vmatpush1.msra.mxu0 0.0
    %116 = vmatprep.subr.mxu0 0.0
    %117 = vmatpush1.msra.mxu0 0.0
    %118 = vmatprep.subr.mxu0 0.0
    %119 = vmatpush1.msra.mxu0 0.0
    %120 = vmatprep.subr.mxu0 0.0
    %121 = vmatpush1.msra.mxu0 0.0
    %122 = vmatprep.mubr.f32.mxu0 0.0
    %123 = vmatmul.mubr.f32.gmra.mrb[0].mxu0 %v46
    %v124 = vpop.f32.mrb[0].mxu0
    %v125 = vadd.f32 %v32, %v124
    %v126 = vpop.f32.mrb[0].mxu0
    %127 = vmatprep.mubr.f32.mxu0 0.0
    %128 = vmatmul.mubr.f32.gmra.mrb[0].mxu0 %v49
    %v129 = vpop.f32.mrb[0].mxu0
    %v130 = vadd.f32 %v37, %v129
    %v131 = vpop.f32.mrb[0].mxu0
    %132 = vmatprep.mubr.f32.mxu0 0.0
    %133 = vmatmul.mubr.f32.gmra.mrb[0].mxu0 %v52
    %v134 = vpop.f32.mrb[0].mxu0
    %v135 = vadd.f32 %v42, %v134
    %v136 = vpop.f32.mrb[0].mxu0
    %137 = vdwg.mxu0
    %v138 = vxor.u32 %v125, 2147483648
    %v139 = vxor.u32 %v130, 2147483648
    %v140 = vxor.u32 %v135, 2147483648
    %v141 = vmul.f32 %v138, 1.442695
    %v142 = vpow.pop %v141
    %v143 = vmul.f32 %v139, 1.442695
    %v144 = vpow.pop %v143
    %v145 = vmul.f32 %v140, 1.442695
    %v146 = vpow.pop %v145
    %v147 = vadd.f32 %v142, 1.0
    %v148 = vadd.f32 %v144, 1.0
    %v149 = vadd.f32 %v146, 1.0
    %v150 = vrcp.pop %v147
    %v151 = vmul.f32 1.0, %v150
    %v152 = vrcp.pop %v148
    %v153 = vmul.f32 1.0, %v152
    %v154 = vrcp.pop %v149
    %v155 = vmul.f32 1.0, %v154
    %v156 = vld [vmem:[%s3] sm:$0x3f]
    %v157 = vld [vmem:[%s4] sm:$0x3f]
    %159 = vset.pattern.permute.xlu0 0
    %160 = vperm.xlu0 %159, %v157
    %v161 = vpop.permute.xlu0 %160
    %vm163 = vcmask 162816
    %v165 = vsel %vm163, %v156, 0
    %vm167 = vcmask 1043456
    %v169 = vsel %vm167, %v155, 0
    %171 = vmatprep.subr.mxu0 0.0
    %172 = vmatpush1.msra.mxu0 %v151
    %173 = vmatprep.subr.mxu0 0.0
    %174 = vmatpush1.msra.mxu0 %v153
    %175 = vmatprep.subr.mxu0 0.0
    %176 = vmatpush1.msra.mxu0 %v169
    %177 = vmatprep.subr.mxu0 0.0
    %178 = vmatpush1.msra.mxu0 0.0
    %179 = vmatprep.subr.mxu0 0.0
    %180 = vmatpush1.msra.mxu0 0.0
    %181 = vmatprep.subr.mxu0 0.0
    %182 = vmatpush1.msra.mxu0 0.0
    %183 = vmatprep.subr.mxu0 0.0
    %184 = vmatpush1.msra.mxu0 0.0
    %185 = vmatprep.subr.mxu0 0.0
    %186 = vmatpush1.msra.mxu0 0.0
    %187 = vmatprep.subr.mxu0 0.0
    %188 = vmatpush1.msra.mxu0 0.0
    %189 = vmatprep.subr.mxu0 0.0
    %190 = vmatpush1.msra.mxu0 0.0
    %191 = vmatprep.subr.mxu0 0.0
    %192 = vmatpush1.msra.mxu0 0.0
    %193 = vmatprep.subr.mxu0 0.0
    %194 = vmatpush1.msra.mxu0 0.0
    %195 = vmatprep.subr.mxu0 0.0
    %196 = vmatpush1.msra.mxu0 0.0
    %197 = vmatprep.subr.mxu0 0.0
    %198 = vmatpush1.msra.mxu0 0.0
    %199 = vmatprep.subr.mxu0 0.0
    %200 = vmatpush1.msra.mxu0 0.0
    %201 = vmatprep.subr.mxu0 0.0
    %202 = vmatpush1.msra.mxu0 0.0
    %203 = vmatprep.subr.mxu0 0.0
    %204 = vmatpush1.msra.mxu0 0.0
    %205 = vmatprep.subr.mxu0 0.0
    %206 = vmatpush1.msra.mxu0 0.0
    %207 = vmatprep.subr.mxu0 0.0
    %208 = vmatpush1.msra.mxu0 0.0
    %209 = vmatprep.subr.mxu0 0.0
    %210 = vmatpush1.msra.mxu0 0.0
    %211 = vmatprep.subr.mxu0 0.0
    %212 = vmatpush1.msra.mxu0 0.0
    %213 = vmatprep.subr.mxu0 0.0
    %214 = vmatpush1.msra.mxu0 0.0
    %215 = vmatprep.subr.mxu0 0.0
    %216 = vmatpush1.msra.mxu0 0.0
    %217 = vmatprep.subr.mxu0 0.0
    %218 = vmatpush1.msra.mxu0 0.0
    %219 = vmatprep.subr.mxu0 0.0
    %220 = vmatpush1.msra.mxu0 0.0
    %221 = vmatprep.subr.mxu0 0.0
    %222 = vmatpush1.msra.mxu0 0.0
    %223 = vmatprep.subr.mxu0 0.0
    %224 = vmatpush1.msra.mxu0 0.0
    %225 = vmatprep.subr.mxu0 0.0
    %226 = vmatpush1.msra.mxu0 0.0
    %227 = vmatprep.subr.mxu0 0.0
    %228 = vmatpush1.msra.mxu0 0.0
    %229 = vmatprep.subr.mxu0 0.0
    %230 = vmatpush1.msra.mxu0 0.0
    %231 = vmatprep.subr.mxu0 0.0
    %232 = vmatpush1.msra.mxu0 0.0
    %233 = vmatprep.subr.mxu0 0.0
    %234 = vmatpush1.msra.mxu0 0.0
    %235 = vmatprep.mubr.f32.mxu0 0.0
    %236 = vmatmul.mubr.f32.gmra.mrb[0].mxu0 %v165
    %v237 = vpop.f32.mrb[0].mxu0
    %v238 = vadd.f32 %v161, %v237
    %v239 = vpop.f32.mrb[0].mxu0
    %240 = vdwg.mxu0
    %241 = vst [vmem:[#allocation2] sm:$0x3f] %v238
    // Predicated region
    $region22: #{tpu_custom_call.1} parent=1 // pred_check
      _
    $region23: #{tpu_custom_call.1} parent=1 // pred_check_branch
      %243 = sbr.rel (0) target = $region25
    $region24: #{tpu_custom_call.1} parent=1 // pred_region
      %s245 = ssub.s32 128, 128
      %246 = vsyncadd [#allocation3], %s245
      %s248 = sshll.u32 [#allocation2], 4
      %s249 = int_to_ptr.vmem [resolvable:$true] %s248
      %251 = dma.vmem_to_hbm [thread:$0]  %s249, 128, %s5, [#allocation3]
    $region25: #{tpu_custom_call.1} parent=1 // pred_fallthru
      _
    // Predicated region
    $region26: #{tpu_custom_call.1} parent=1 // pred_check
      _
    $region27: #{tpu_custom_call.1} parent=1 // pred_check_branch
      %253 = sbr.rel (0) target = $region29
    $region28: #{tpu_custom_call.1} parent=1 // pred_region
      %254 = dma.done [#allocation3], 128
    $region29: #{tpu_custom_call.1} parent=1 // pred_fallthru
      _
    %255 = vsyncpa [#allocation3], 1

</llo_original>
